<compile_context>
chip_gen: v5e
topology: v5e:2x2
jax: 0.10.0
libtpu: 0.0.40
codegen_flags: <defaults>
</compile_context>

<pallas_src>
import functools

import numpy as np
import jax
import jax.numpy as jnp
from jax.experimental import pallas as pl
from jax.experimental.pallas import tpu as pltpu

BN_EPS = 1e-5
LEAKY_SLOPE = 0.01   # nn.LeakyReLU default negative_slope
LANE = 128
SUBLANE = 8


def _round_up(x, m):
    return (x + m - 1) // m * m


def build_layer_config(num_features, hidden_layers):
    """Return list of (in_dim, out_dim, has_batchnorm) for the encoder+decoder chain."""
    layers = []
    # encoder: layers_dim = [F] + hidden + [hidden[-1]]
    enc_dims = [num_features] + list(hidden_layers) + [hidden_layers[-1]]
    for i in range(len(hidden_layers)):
        layers.append((enc_dims[i], enc_dims[i + 1], True))
    layers.append((enc_dims[-2], enc_dims[-1], False))   # encoder output layer
    # decoder: layers_dim = [rev[0]] + rev + [F]
    rev = list(hidden_layers)[::-1]
    dec_dims = [rev[0]] + rev + [num_features]
    for i in range(len(rev)):
        layers.append((dec_dims[i], dec_dims[i + 1], True))
    layers.append((dec_dims[-2], dec_dims[-1], False))   # decoder output layer
    return layers


def init_params(key, layer_cfg):
    """Xavier-uniform weights, PyTorch-default uniform biases, default BN stats."""
    params = []
    for (din, dout, has_bn) in layer_cfg:
        key, kw, kb = jax.random.split(key, 3)
        limit = float(np.sqrt(6.0 / (din + dout)))      # xavier_uniform_
        w = jax.random.uniform(kw, (din, dout), jnp.float32, -limit, limit)
        bbound = float(1.0 / np.sqrt(din))              # nn.Linear default bias init
        b = jax.random.uniform(kb, (1, dout), jnp.float32, -bbound, bbound)
        bn = None
        if has_bn:
            bn = dict(gamma=jnp.ones((dout,), jnp.float32),
                      beta=jnp.zeros((dout,), jnp.float32),
                      mean=jnp.zeros((dout,), jnp.float32),
                      var=jnp.ones((dout,), jnp.float32))
        params.append(dict(w=w, b=b, bn=bn))
    return params


def fold_batchnorm(params, layer_cfg):
    """Fold eval-mode BatchNorm1d (running stats + affine) into the preceding Linear.

    (hW + b) -> gamma * ((hW + b) - mean) / sqrt(var + eps) + beta
             == h (W * s) + (b * s + beta - mean * s),  s = gamma / sqrt(var + eps)
    """
    folded = []
    for p, (_, _, has_bn) in zip(params, layer_cfg):
        w = p["w"].astype(jnp.float32)
        b = p["b"].astype(jnp.float32).reshape(1, -1)
        if has_bn:
            bn = p["bn"]
            s = bn["gamma"] / jnp.sqrt(bn["var"] + BN_EPS)
            w = w * s[None, :]
            b = b * s[None, :] + (bn["beta"] - bn["mean"] * s)[None, :]
        folded.append((w, b))
    return folded


def prepare_params(params, layer_cfg, compute_dtype=jnp.bfloat16):
    """Fold BN, zero-pad all dims up to LANE multiples, cast weights to bf16."""
    prepared = []
    for w, b in fold_batchnorm(params, layer_cfg):
        din, dout = w.shape
        din_p, dout_p = _round_up(din, LANE), _round_up(dout, LANE)
        w_p = jnp.zeros((din_p, dout_p), jnp.float32).at[:din, :dout].set(w)
        b_p = jnp.zeros((1, dout_p), jnp.float32).at[:, :dout].set(b)
        prepared.append((w_p.astype(compute_dtype), b_p))   # bias stays f32
    return prepared


def _aae_kernel(x_ref, *refs, n_layers, compute_dtype):
    """Fused MLP chain: (bf16 matmul -> f32 bias -> LeakyReLU) per layer."""
    out_ref = refs[-1]
    wb = refs[:-1]
    h = x_ref[...]                                    # (bt, F_pad), compute_dtype
    acc = None
    for li in range(n_layers):
        w = wb[2 * li][...]                           # (din_p, dout_p), compute_dtype
        b = wb[2 * li + 1][...]                       # (1, dout_p), f32
        acc = jnp.dot(h, w, preferred_element_type=jnp.float32) + b
        acc = jnp.where(acc > 0, acc, LEAKY_SLOPE * acc)   # LeakyReLU (f32, VPU)
        h = acc.astype(compute_dtype)
    out_ref[...] = acc.astype(out_ref.dtype)


def choose_batch_tile(batch):
    """Primary tuning knob: big tiles feed the MXU and amortize per-step overhead,
    but keep the grid length >= 2 so the parallel batch axis can shard across both
    v7x TensorCores."""
    half = _round_up(pl.cdiv(batch, 2), SUBLANE)
    return int(max(SUBLANE, min(256, half)))


def aae_forward(x, params, layer_cfg, *, batch_tile=None, compute_dtype=jnp.bfloat16):
    """x: (B, F) float.  params: output of init_params.  Returns (B, F)."""
    B, F = x.shape
    out_dtype = x.dtype
    if batch_tile is None:
        batch_tile = choose_batch_tile(B)
    batch_tile = _round_up(int(batch_tile), SUBLANE)
    B_pad = _round_up(B, batch_tile)
    F_pad = _round_up(F, LANE)

    prepared = prepare_params(params, layer_cfg, compute_dtype)
    n_layers = len(prepared)
    assert prepared[0][0].shape[0] == F_pad and prepared[-1][0].shape[1] == F_pad

    # Zero-pad input (ragged batch + lane padding).  Zeros stay exactly zero
    # through every padded Linear + LeakyReLU, so the result is unchanged.
    x_c = x.astype(compute_dtype)
    if (B_pad, F_pad) != (B, F):
        x_c = jnp.pad(x_c, ((0, B_pad - B), (0, F_pad - F)))

    in_specs = [pl.BlockSpec((batch_tile, F_pad), lambda i: (i, 0))]
    flat_params = []
    for w, b in prepared:
        # Grid-invariant weights/biases: index_map always (0, 0).
        in_specs.append(pl.BlockSpec(w.shape, lambda i: (0, 0)))
        in_specs.append(pl.BlockSpec(b.shape, lambda i: (0, 0)))
        flat_params.extend([w, b])
    out_spec = pl.BlockSpec((batch_tile, F_pad), lambda i: (i, 0))

    # Explicit VMEM budget: double-buffered x/out tiles + double-buffered weights
    # + f32 intermediates, with 2x headroom; capped below v7x's 64 MiB physical.
    weight_bytes = sum(a.size * a.dtype.itemsize for a in flat_params)
    max_dim = max(w.shape[1] for w, _ in prepared)
    io_bytes = batch_tile * F_pad * (x_c.dtype.itemsize + jnp.dtype(out_dtype).itemsize)
    inter_bytes = batch_tile * max_dim * 4 * (n_layers + 2)
    vmem_limit = int(min(max(2 * (2 * (weight_bytes + io_bytes) + inter_bytes),
                             8 << 20),
                         48 << 20))

    kernel = functools.partial(_aae_kernel, n_layers=n_layers,
                               compute_dtype=compute_dtype)

    out_padded = pl.pallas_call(
        kernel,
        out_shape=jax.ShapeDtypeStruct((B_pad, F_pad), out_dtype),
        grid_spec=pltpu.PrefetchScalarGridSpec(
            num_scalar_prefetch=0,
            grid=(B_pad // batch_tile,),
            in_specs=in_specs,
            out_specs=out_spec,
        ),
        compiler_params=pltpu.CompilerParams(
            dimension_semantics=("parallel",),
            vmem_limit_bytes=vmem_limit,
        ),
    )(x_c, *flat_params)

    return out_padded[:B, :F]


def reference_forward(x, params, layer_cfg, compute_dtype=jnp.bfloat16):
    """Pure-JAX reference mirroring the kernel's bf16-operand / f32-accumulate math."""
    folded = fold_batchnorm(params, layer_cfg)
    h = x.astype(compute_dtype)
    acc = None
    for w, b in folded:
        acc = jnp.dot(h, w.astype(compute_dtype),
                      preferred_element_type=jnp.float32) + b
        acc = jnp.where(acc > 0, acc, LEAKY_SLOPE * acc)
        h = acc.astype(compute_dtype)
    return acc.astype(x.dtype)


if __name__ == "__main__":
    num_features = 32
    hidden_layers = [32, 16]
    batch = 16

    layer_cfg = build_layer_config(num_features, hidden_layers)

    key = jax.random.PRNGKey(0)
    key, kx = jax.random.split(key)
    x = jax.random.normal(kx, (batch, num_features), jnp.float32)
    params = init_params(key, layer_cfg)

    out = aae_forward(x, params, layer_cfg)     # default tile policy (grid length 2 here)
    out = jax.block_until_ready(out)

    ref = reference_forward(x, params, layer_cfg)
    assert out.shape == (batch, num_features)
    assert jnp.allclose(out, ref, atol=2e-3, rtol=2e-3), "mismatch vs reference"

    print("KERNEL_OK")
</pallas_src>

<mosaic_0001>
module attributes {stable_mosaic.version = 11 : i64} {
  func.func @_aae_kernel(%arg0: i32, %arg1: memref<8x128xbf16, #tpu.memory_space<vmem>>, %arg2: memref<128x128xbf16, #tpu.memory_space<vmem>>, %arg3: memref<1x128xf32, #tpu.memory_space<vmem>>, %arg4: memref<128x128xbf16, #tpu.memory_space<vmem>>, %arg5: memref<1x128xf32, #tpu.memory_space<vmem>>, %arg6: memref<128x128xbf16, #tpu.memory_space<vmem>>, %arg7: memref<1x128xf32, #tpu.memory_space<vmem>>, %arg8: memref<128x128xbf16, #tpu.memory_space<vmem>>, %arg9: memref<1x128xf32, #tpu.memory_space<vmem>>, %arg10: memref<128x128xbf16, #tpu.memory_space<vmem>>, %arg11: memref<1x128xf32, #tpu.memory_space<vmem>>, %arg12: memref<128x128xbf16, #tpu.memory_space<vmem>>, %arg13: memref<1x128xf32, #tpu.memory_space<vmem>>, %arg14: memref<8x128xf32, #tpu.memory_space<vmem>>) attributes {dimension_semantics = [#tpu.dimension_semantics<parallel>], iteration_bounds = array<i64: 2>, scalar_prefetch = 0 : i64, scratch_operands = 0 : i64, tpu.core_type = #tpu.core_type<tc>, window_params = [{transform_indices = @transform_0, window_bounds = array<i64: 8, 128>}, {pipeline_mode = #tpu.pipeline_mode<synchronous>, transform_indices = @transform_1, window_bounds = array<i64: 128, 128>}, {pipeline_mode = #tpu.pipeline_mode<synchronous>, transform_indices = @transform_2, window_bounds = array<i64: 1, 128>}, {pipeline_mode = #tpu.pipeline_mode<synchronous>, transform_indices = @transform_3, window_bounds = array<i64: 128, 128>}, {pipeline_mode = #tpu.pipeline_mode<synchronous>, transform_indices = @transform_4, window_bounds = array<i64: 1, 128>}, {pipeline_mode = #tpu.pipeline_mode<synchronous>, transform_indices = @transform_5, window_bounds = array<i64: 128, 128>}, {pipeline_mode = #tpu.pipeline_mode<synchronous>, transform_indices = @transform_6, window_bounds = array<i64: 1, 128>}, {pipeline_mode = #tpu.pipeline_mode<synchronous>, transform_indices = @transform_7, window_bounds = array<i64: 128, 128>}, {pipeline_mode = #tpu.pipeline_mode<synchronous>, transform_indices = @transform_8, window_bounds = array<i64: 1, 128>}, {pipeline_mode = #tpu.pipeline_mode<synchronous>, transform_indices = @transform_9, window_bounds = array<i64: 128, 128>}, {pipeline_mode = #tpu.pipeline_mode<synchronous>, transform_indices = @transform_10, window_bounds = array<i64: 1, 128>}, {pipeline_mode = #tpu.pipeline_mode<synchronous>, transform_indices = @transform_11, window_bounds = array<i64: 128, 128>}, {pipeline_mode = #tpu.pipeline_mode<synchronous>, transform_indices = @transform_12, window_bounds = array<i64: 1, 128>}, {transform_indices = @transform_13, window_bounds = array<i64: 8, 128>}]} {
    %c0 = arith.constant 0 : index
    %c0_0 = arith.constant 0 : index
    %0 = vector.load %arg1[%c0, %c0_0] : memref<8x128xbf16, #tpu.memory_space<vmem>>, vector<8x128xbf16>
    %c0_1 = arith.constant 0 : index
    %c0_2 = arith.constant 0 : index
    %1 = vector.load %arg2[%c0_1, %c0_2] : memref<128x128xbf16, #tpu.memory_space<vmem>>, vector<128x128xbf16>
    %c0_3 = arith.constant 0 : index
    %c0_4 = arith.constant 0 : index
    %2 = vector.load %arg3[%c0_3, %c0_4] : memref<1x128xf32, #tpu.memory_space<vmem>>, vector<1x128xf32>
    %cst = arith.constant dense<0.000000e+00> : vector<8x128xf32>
    %3 = tpu.matmul %0, %1, %cst {dimension_numbers = #tpu.dot_dimension_numbers<[1], [0], [0], [1], [0, 0, 1, 1], [], []>} : vector<8x128xbf16>, vector<128x128xbf16>, vector<8x128xf32> -> vector<8x128xf32>
    %4 = vector.broadcast %2 : vector<1x128xf32> to vector<8x128xf32>
    %5 = arith.addf %3, %4 : vector<8x128xf32>
    %cst_5 = arith.constant 0.000000e+00 : f32
    %6 = vector.broadcast %cst_5 : f32 to vector<8x128xf32>
    %7 = arith.cmpf ogt, %5, %6 : vector<8x128xf32>
    %cst_6 = arith.constant 0.00999999977 : f32
    %8 = vector.broadcast %cst_6 : f32 to vector<8x128xf32>
    %9 = arith.mulf %8, %5 : vector<8x128xf32>
    %10 = arith.select %7, %5, %9 : vector<8x128xi1>, vector<8x128xf32>
    %11 = arith.truncf %10 : vector<8x128xf32> to vector<8x128xbf16>
    %c0_7 = arith.constant 0 : index
    %c0_8 = arith.constant 0 : index
    %12 = vector.load %arg4[%c0_7, %c0_8] : memref<128x128xbf16, #tpu.memory_space<vmem>>, vector<128x128xbf16>
    %c0_9 = arith.constant 0 : index
    %c0_10 = arith.constant 0 : index
    %13 = vector.load %arg5[%c0_9, %c0_10] : memref<1x128xf32, #tpu.memory_space<vmem>>, vector<1x128xf32>
    %cst_11 = arith.constant dense<0.000000e+00> : vector<8x128xf32>
    %14 = tpu.matmul %11, %12, %cst_11 {dimension_numbers = #tpu.dot_dimension_numbers<[1], [0], [0], [1], [0, 0, 1, 1], [], []>} : vector<8x128xbf16>, vector<128x128xbf16>, vector<8x128xf32> -> vector<8x128xf32>
    %15 = vector.broadcast %13 : vector<1x128xf32> to vector<8x128xf32>
    %16 = arith.addf %14, %15 : vector<8x128xf32>
    %cst_12 = arith.constant 0.000000e+00 : f32
    %17 = vector.broadcast %cst_12 : f32 to vector<8x128xf32>
    %18 = arith.cmpf ogt, %16, %17 : vector<8x128xf32>
    %cst_13 = arith.constant 0.00999999977 : f32
    %19 = vector.broadcast %cst_13 : f32 to vector<8x128xf32>
    %20 = arith.mulf %19, %16 : vector<8x128xf32>
    %21 = arith.select %18, %16, %20 : vector<8x128xi1>, vector<8x128xf32>
    %22 = arith.truncf %21 : vector<8x128xf32> to vector<8x128xbf16>
    %c0_14 = arith.constant 0 : index
    %c0_15 = arith.constant 0 : index
    %23 = vector.load %arg6[%c0_14, %c0_15] : memref<128x128xbf16, #tpu.memory_space<vmem>>, vector<128x128xbf16>
    %c0_16 = arith.constant 0 : index
    %c0_17 = arith.constant 0 : index
    %24 = vector.load %arg7[%c0_16, %c0_17] : memref<1x128xf32, #tpu.memory_space<vmem>>, vector<1x128xf32>
    %cst_18 = arith.constant dense<0.000000e+00> : vector<8x128xf32>
    %25 = tpu.matmul %22, %23, %cst_18 {dimension_numbers = #tpu.dot_dimension_numbers<[1], [0], [0], [1], [0, 0, 1, 1], [], []>} : vector<8x128xbf16>, vector<128x128xbf16>, vector<8x128xf32> -> vector<8x128xf32>
    %26 = vector.broadcast %24 : vector<1x128xf32> to vector<8x128xf32>
    %27 = arith.addf %25, %26 : vector<8x128xf32>
    %cst_19 = arith.constant 0.000000e+00 : f32
    %28 = vector.broadcast %cst_19 : f32 to vector<8x128xf32>
    %29 = arith.cmpf ogt, %27, %28 : vector<8x128xf32>
    %cst_20 = arith.constant 0.00999999977 : f32
    %30 = vector.broadcast %cst_20 : f32 to vector<8x128xf32>
    %31 = arith.mulf %30, %27 : vector<8x128xf32>
    %32 = arith.select %29, %27, %31 : vector<8x128xi1>, vector<8x128xf32>
    %33 = arith.truncf %32 : vector<8x128xf32> to vector<8x128xbf16>
    %c0_21 = arith.constant 0 : index
    %c0_22 = arith.constant 0 : index
    %34 = vector.load %arg8[%c0_21, %c0_22] : memref<128x128xbf16, #tpu.memory_space<vmem>>, vector<128x128xbf16>
    %c0_23 = arith.constant 0 : index
    %c0_24 = arith.constant 0 : index
    %35 = vector.load %arg9[%c0_23, %c0_24] : memref<1x128xf32, #tpu.memory_space<vmem>>, vector<1x128xf32>
    %cst_25 = arith.constant dense<0.000000e+00> : vector<8x128xf32>
    %36 = tpu.matmul %33, %34, %cst_25 {dimension_numbers = #tpu.dot_dimension_numbers<[1], [0], [0], [1], [0, 0, 1, 1], [], []>} : vector<8x128xbf16>, vector<128x128xbf16>, vector<8x128xf32> -> vector<8x128xf32>
    %37 = vector.broadcast %35 : vector<1x128xf32> to vector<8x128xf32>
    %38 = arith.addf %36, %37 : vector<8x128xf32>
    %cst_26 = arith.constant 0.000000e+00 : f32
    %39 = vector.broadcast %cst_26 : f32 to vector<8x128xf32>
    %40 = arith.cmpf ogt, %38, %39 : vector<8x128xf32>
    %cst_27 = arith.constant 0.00999999977 : f32
    %41 = vector.broadcast %cst_27 : f32 to vector<8x128xf32>
    %42 = arith.mulf %41, %38 : vector<8x128xf32>
    %43 = arith.select %40, %38, %42 : vector<8x128xi1>, vector<8x128xf32>
    %44 = arith.truncf %43 : vector<8x128xf32> to vector<8x128xbf16>
    %c0_28 = arith.constant 0 : index
    %c0_29 = arith.constant 0 : index
    %45 = vector.load %arg10[%c0_28, %c0_29] : memref<128x128xbf16, #tpu.memory_space<vmem>>, vector<128x128xbf16>
    %c0_30 = arith.constant 0 : index
    %c0_31 = arith.constant 0 : index
    %46 = vector.load %arg11[%c0_30, %c0_31] : memref<1x128xf32, #tpu.memory_space<vmem>>, vector<1x128xf32>
    %cst_32 = arith.constant dense<0.000000e+00> : vector<8x128xf32>
    %47 = tpu.matmul %44, %45, %cst_32 {dimension_numbers = #tpu.dot_dimension_numbers<[1], [0], [0], [1], [0, 0, 1, 1], [], []>} : vector<8x128xbf16>, vector<128x128xbf16>, vector<8x128xf32> -> vector<8x128xf32>
    %48 = vector.broadcast %46 : vector<1x128xf32> to vector<8x128xf32>
    %49 = arith.addf %47, %48 : vector<8x128xf32>
    %cst_33 = arith.constant 0.000000e+00 : f32
    %50 = vector.broadcast %cst_33 : f32 to vector<8x128xf32>
    %51 = arith.cmpf ogt, %49, %50 : vector<8x128xf32>
    %cst_34 = arith.constant 0.00999999977 : f32
    %52 = vector.broadcast %cst_34 : f32 to vector<8x128xf32>
    %53 = arith.mulf %52, %49 : vector<8x128xf32>
    %54 = arith.select %51, %49, %53 : vector<8x128xi1>, vector<8x128xf32>
    %55 = arith.truncf %54 : vector<8x128xf32> to vector<8x128xbf16>
    %c0_35 = arith.constant 0 : index
    %c0_36 = arith.constant 0 : index
    %56 = vector.load %arg12[%c0_35, %c0_36] : memref<128x128xbf16, #tpu.memory_space<vmem>>, vector<128x128xbf16>
    %c0_37 = arith.constant 0 : index
    %c0_38 = arith.constant 0 : index
    %57 = vector.load %arg13[%c0_37, %c0_38] : memref<1x128xf32, #tpu.memory_space<vmem>>, vector<1x128xf32>
    %cst_39 = arith.constant dense<0.000000e+00> : vector<8x128xf32>
    %58 = tpu.matmul %55, %56, %cst_39 {dimension_numbers = #tpu.dot_dimension_numbers<[1], [0], [0], [1], [0, 0, 1, 1], [], []>} : vector<8x128xbf16>, vector<128x128xbf16>, vector<8x128xf32> -> vector<8x128xf32>
    %59 = vector.broadcast %57 : vector<1x128xf32> to vector<8x128xf32>
    %60 = arith.addf %58, %59 : vector<8x128xf32>
    %cst_40 = arith.constant 0.000000e+00 : f32
    %61 = vector.broadcast %cst_40 : f32 to vector<8x128xf32>
    %62 = arith.cmpf ogt, %60, %61 : vector<8x128xf32>
    %cst_41 = arith.constant 0.00999999977 : f32
    %63 = vector.broadcast %cst_41 : f32 to vector<8x128xf32>
    %64 = arith.mulf %63, %60 : vector<8x128xf32>
    %65 = arith.select %62, %60, %64 : vector<8x128xi1>, vector<8x128xf32>
    %c0_42 = arith.constant 0 : index
    %c0_43 = arith.constant 0 : index
    %66 = vector.load %arg14[%c0_42, %c0_43] : memref<8x128xf32, #tpu.memory_space<vmem>>, vector<8x128xf32>
    tpu.vector_store %arg14[%c0_42, %c0_43], %65 {strides = array<i32>} : memref<8x128xf32, #tpu.memory_space<vmem>>, vector<8x128xf32>,
    return
  }
  func.func @transform_0(%arg0: i32) -> (i32, i32) {
    %c0_i32 = arith.constant 0 : i32
    %c0_i32_0 = arith.constant 0 : i32
    return %arg0, %c0_i32 : i32, i32
  }
  func.func @transform_1(%arg0: i32) -> (i32, i32) {
    %c0_i32 = arith.constant 0 : i32
    %c0_i32_0 = arith.constant 0 : i32
    %c0_i32_1 = arith.constant 0 : i32
    return %c0_i32, %c0_i32_0 : i32, i32
  }
  func.func @transform_2(%arg0: i32) -> (i32, i32) {
    %c0_i32 = arith.constant 0 : i32
    %c0_i32_0 = arith.constant 0 : i32
    %c0_i32_1 = arith.constant 0 : i32
    return %c0_i32, %c0_i32_0 : i32, i32
  }
  func.func @transform_3(%arg0: i32) -> (i32, i32) {
    %c0_i32 = arith.constant 0 : i32
    %c0_i32_0 = arith.constant 0 : i32
    %c0_i32_1 = arith.constant 0 : i32
    return %c0_i32, %c0_i32_0 : i32, i32
  }
  func.func @transform_4(%arg0: i32) -> (i32, i32) {
    %c0_i32 = arith.constant 0 : i32
    %c0_i32_0 = arith.constant 0 : i32
    %c0_i32_1 = arith.constant 0 : i32
    return %c0_i32, %c0_i32_0 : i32, i32
  }
  func.func @transform_5(%arg0: i32) -> (i32, i32) {
    %c0_i32 = arith.constant 0 : i32
    %c0_i32_0 = arith.constant 0 : i32
    %c0_i32_1 = arith.constant 0 : i32
    return %c0_i32, %c0_i32_0 : i32, i32
  }
  func.func @transform_6(%arg0: i32) -> (i32, i32) {
    %c0_i32 = arith.constant 0 : i32
    %c0_i32_0 = arith.constant 0 : i32
    %c0_i32_1 = arith.constant 0 : i32
    return %c0_i32, %c0_i32_0 : i32, i32
  }
  func.func @transform_7(%arg0: i32) -> (i32, i32) {
    %c0_i32 = arith.constant 0 : i32
    %c0_i32_0 = arith.constant 0 : i32
    %c0_i32_1 = arith.constant 0 : i32
    return %c0_i32, %c0_i32_0 : i32, i32
  }
  func.func @transform_8(%arg0: i32) -> (i32, i32) {
    %c0_i32 = arith.constant 0 : i32
    %c0_i32_0 = arith.constant 0 : i32
    %c0_i32_1 = arith.constant 0 : i32
    return %c0_i32, %c0_i32_0 : i32, i32
  }
  func.func @transform_9(%arg0: i32) -> (i32, i32) {
    %c0_i32 = arith.constant 0 : i32
    %c0_i32_0 = arith.constant 0 : i32
    %c0_i32_1 = arith.constant 0 : i32
    return %c0_i32, %c0_i32_0 : i32, i32
  }
  func.func @transform_10(%arg0: i32) -> (i32, i32) {
    %c0_i32 = arith.constant 0 : i32
    %c0_i32_0 = arith.constant 0 : i32
    %c0_i32_1 = arith.constant 0 : i32
    return %c0_i32, %c0_i32_0 : i32, i32
  }
  func.func @transform_11(%arg0: i32) -> (i32, i32) {
    %c0_i32 = arith.constant 0 : i32
    %c0_i32_0 = arith.constant 0 : i32
    %c0_i32_1 = arith.constant 0 : i32
    return %c0_i32, %c0_i32_0 : i32, i32
  }
  func.func @transform_12(%arg0: i32) -> (i32, i32) {
    %c0_i32 = arith.constant 0 : i32
    %c0_i32_0 = arith.constant 0 : i32
    %c0_i32_1 = arith.constant 0 : i32
    return %c0_i32, %c0_i32_0 : i32, i32
  }
  func.func @transform_13(%arg0: i32) -> (i32, i32) {
    %c0_i32 = arith.constant 0 : i32
    %c0_i32_0 = arith.constant 0 : i32
    return %arg0, %c0_i32 : i32, i32
  }
}

</mosaic_0001>

<llo_original>
// kernel: tpu_custom_call.1
$region0: #{tpu_custom_call.1}
  #allocation0 [shape = 'u32[]', space=smem, size = 0x4, offset = 0x4, fixed_abs, tag = 'smem constant byte address 0x4 - core index']
  #allocation1 [shape = 'u32[72,128]{1,0:T(1,128)}', space=vmem, size = 0x9000, scoped, tag = 'internal scratch']
  %s0 = inlined_call_operand.hbm [shape: bf16[16,128], index: 0, kind: input, shape index: {}]
  %s1 = inlined_call_operand.hbm [shape: bf16[128,128], index: 1, kind: input, shape index: {}]
  %s2 = inlined_call_operand.vmem [shape: f32[1,128], index: 2, kind: input, shape index: {}]
  %s3 = inlined_call_operand.hbm [shape: bf16[128,128], index: 3, kind: input, shape index: {}]
  %s4 = inlined_call_operand.vmem [shape: f32[1,128], index: 4, kind: input, shape index: {}]
  %s5 = inlined_call_operand.hbm [shape: bf16[128,128], index: 5, kind: input, shape index: {}]
  %s6 = inlined_call_operand.vmem [shape: f32[1,128], index: 6, kind: input, shape index: {}]
  %s7 = inlined_call_operand.hbm [shape: bf16[128,128], index: 7, kind: input, shape index: {}]
  %s8 = inlined_call_operand.vmem [shape: f32[1,128], index: 8, kind: input, shape index: {}]
  %s9 = inlined_call_operand.hbm [shape: bf16[128,128], index: 9, kind: input, shape index: {}]
  %s10 = inlined_call_operand.vmem [shape: f32[1,128], index: 10, kind: input, shape index: {}]
  %s11 = inlined_call_operand.hbm [shape: bf16[128,128], index: 11, kind: input, shape index: {}]
  %s12 = inlined_call_operand.vmem [shape: f32[1,128], index: 12, kind: input, shape index: {}]
  %s13 = inlined_call_operand.hbm [shape: f32[16,128], index: 13, kind: output, shape index: {}]
  %s14 = sld [smem:[#allocation0]]
  $region113: #{tpu_custom_call.1} parent=0
    _
  %s16 = ssub.s32 1, %s14
  %s17 = scalar_select 0, %s16, %s14
  $region1: #{tpu_custom_call.1} parent=0
    #allocation2 [shape = 'u8[4096]{0}', space=vmem, size = 0x1000, scoped, tag = 'input window, operand 0']
    #allocation3 [shape = 's32[2]{0}', space=sflag, size = 0x8, scoped, tag = 'scoped memory for tpu_custom_call.1']
    #allocation4 [shape = 's32[2]{0}', space=sflag, size = 0x8, scoped, tag = 'scoped memory for tpu_custom_call.1']
    #allocation5 [shape = 'u8[32768]{0}', space=vmem, size = 0x8000, scoped, tag = 'input window, operand 1, single buffered']
    #allocation6 [shape = 's32[1]{0}', space=sflag, size = 0x4, scoped, tag = 'scoped memory for tpu_custom_call.1']
    #allocation7 [shape = 'u8[32768]{0}', space=vmem, size = 0x8000, scoped, tag = 'input window, operand 3, single buffered']
    #allocation8 [shape = 'u8[32768]{0}', space=vmem, size = 0x8000, scoped, tag = 'input window, operand 5, single buffered']
    #allocation9 [shape = 's32[1]{0}', space=sflag, size = 0x4, scoped, tag = 'scoped memory for tpu_custom_call.1']
    #allocation10 [shape = 'u8[32768]{0}', space=vmem, size = 0x8000, scoped, tag = 'input window, operand 7, single buffered']
    #allocation11 [shape = 'u8[32768]{0}', space=vmem, size = 0x8000, scoped, tag = 'input window, operand 9, single buffered']
    #allocation12 [shape = 's32[1]{0}', space=sflag, size = 0x4, scoped, tag = 'scoped memory for tpu_custom_call.1']
    #allocation13 [shape = 'u8[32768]{0}', space=vmem, size = 0x8000, scoped, tag = 'input window, operand 11, single buffered']
    #allocation14 [shape = 'u8[8192]{0}', space=vmem, size = 0x2000, scoped, tag = 'output window, operand 0']
    %18 = vsyncpa [#allocation3], 0
    %s19 = scalar_lea.sflag [#allocation3], 1
    %20 = vsyncpa %s19, 0
    %21 = vsyncpa [#allocation6], 0
    %22 = vsyncpa [#allocation9], 0
    %23 = vsyncpa [#allocation12], 0
    %24 = vsyncpa [#allocation4], 0
    %s25 = scalar_lea.sflag [#allocation4], 1
    %26 = vsyncpa %s25, 0
    loop: start=0, step=1, limit=4
    $region2: #{tpu_custom_call.1} parent=1 // loop_pre_header
      _
    $region3: #{tpu_custom_call.1} parent=1 // loop_header
      %s28 = sphi 0, %s32
      %p29 = scmp.ge.s32.totalorder %s28, 4
      %s38 = sphi 0, %s40
      %s41 = sphi 0, %s38
      %s42 = sphi 0, %s41
      %s58 = sphi 0, %s42
      %s62 = sphi 0, %s62
      %s64 = sphi 0, %s62
      %s65 = sphi 0, %s64
      %s79 = sphi 0, %s65
      %s83 = sphi 0, %s83
      %s85 = sphi 0, %s83
      %s86 = sphi 0, %s85
      %s100 = sphi 0, %s86
      %s104 = sphi 0, %s104
      %s106 = sphi 0, %s104
      %s107 = sphi 0, %s106
      %s121 = sphi 0, %s107
      %s125 = sphi 0, %s125
      %s127 = sphi 0, %s125
      %s128 = sphi 0, %s127
      %s142 = sphi 0, %s128
      %s146 = sphi 0, %s146
      %s148 = sphi 0, %s146
      %s149 = sphi 0, %s148
      %s163 = sphi 0, %s149
      %s167 = sphi 0, %s167
      %s169 = sphi 0, %s167
      %s170 = sphi 0, %s169
      %s184 = sphi 0, %s170
      %s188 = sphi 0, %s188
      %s190 = sphi 0, %s188
      %s191 = sphi 0, %s190
      %s205 = sphi 0, %s191
      %s209 = sphi 0, %s209
      %s211 = sphi 0, %s209
      %s212 = sphi 0, %s211
      %s226 = sphi 0, %s212
      %s230 = sphi 0, %s230
      %s232 = sphi 0, %s230
      %s233 = sphi 0, %s232
      %s247 = sphi 0, %s233
      %s251 = sphi 0, %s251
      %s253 = sphi 0, %s251
      %s254 = sphi 0, %s253
      %s268 = sphi 0, %s254
      %s272 = sphi 0, %s272
      %s274 = sphi 0, %s272
      %s275 = sphi 0, %s274
      %s289 = sphi 0, %s275
      %s293 = sphi 0, %s293
      %s295 = sphi 0, %s293
      %s296 = sphi 0, %s295
      %s310 = sphi 0, %s296
      %s316 = sphi 0, %s318
      %s319 = sphi 0, %s316
      %s320 = sphi 0, %s319
      %s336 = sphi 0, %s320
    $region4: #{tpu_custom_call.1} parent=1 // loop_header_branch
      %31 = sbr.rel (%p29) target = $region8
    $region5: #{tpu_custom_call.1} parent=1 // loop_body
      %s33 = ssub.s32 %s28, 1
      %s34 = ssub.s32 %s28, 2
      %s35 = sadd.s32 %s28, 1
      %s36 = ssub.s32 %s28, %s35
      %p37 = scmp.eq.s32.totalorder %s36, 0
      %s39 = sadd.s32 %s38, 1
      %s40 = scalar_select %p37, %s38, %s39
      %p43 = pneg %p37
      %p44 = scmp.eq.s32.totalorder %s28, 1
      %p45 = por %p43, %p44
      %p46 = scmp.ne.s32.totalorder %s38, %s41
      %p47 = scmp.eq.s32.totalorder %s28, 0
      %p48 = por %p46, %p47
      %p49 = scmp.ne.s32.totalorder %s38, %s41
      %p50 = scmp.eq.s32.totalorder %s33, 1
      %p51 = por %p49, %p50
      %p52 = scmp.ne.s32.totalorder %s41, %s42
      %p53 = scmp.eq.s32.totalorder %s33, 0
      %p54 = por %p52, %p53
      %p55 = scmp.ne.s32.totalorder %s41, %s42
      %p56 = scmp.eq.s32.totalorder %s34, 1
      %p57 = por %p55, %p56
      %p59 = scmp.ne.s32.totalorder %s42, %s58
      %p60 = scmp.eq.s32.totalorder %s34, 0
      %p61 = por %p59, %p60
      %s63 = sadd.s32 %s62, 1
      %p66 = scmp.eq.s32.totalorder %s28, 1
      %p67 = scmp.ne.s32.totalorder %s62, %s64
      %p68 = scmp.eq.s32.totalorder %s28, 0
      %p69 = por %p67, %p68
      %p70 = scmp.ne.s32.totalorder %s62, %s64
      %p71 = scmp.eq.s32.totalorder %s33, 1
      %p72 = por %p70, %p71
      %p73 = scmp.ne.s32.totalorder %s64, %s65
      %p74 = scmp.eq.s32.totalorder %s33, 0
      %p75 = por %p73, %p74
      %p76 = scmp.ne.s32.totalorder %s64, %s65
      %p77 = scmp.eq.s32.totalorder %s34, 1
      %p78 = por %p76, %p77
      %p80 = scmp.ne.s32.totalorder %s65, %s79
      %p81 = scmp.eq.s32.totalorder %s34, 0
      %p82 = por %p80, %p81
      %s84 = sadd.s32 %s83, 1
      %p87 = scmp.eq.s32.totalorder %s28, 1
      %p88 = scmp.ne.s32.totalorder %s83, %s85
      %p89 = scmp.eq.s32.totalorder %s28, 0
      %p90 = por %p88, %p89
      %p91 = scmp.ne.s32.totalorder %s83, %s85
      %p92 = scmp.eq.s32.totalorder %s33, 1
      %p93 = por %p91, %p92
      %p94 = scmp.ne.s32.totalorder %s85, %s86
      %p95 = scmp.eq.s32.totalorder %s33, 0
      %p96 = por %p94, %p95
      %p97 = scmp.ne.s32.totalorder %s85, %s86
      %p98 = scmp.eq.s32.totalorder %s34, 1
      %p99 = por %p97, %p98
      %p101 = scmp.ne.s32.totalorder %s86, %s100
      %p102 = scmp.eq.s32.totalorder %s34, 0
      %p103 = por %p101, %p102
      %s105 = sadd.s32 %s104, 1
      %p108 = scmp.eq.s32.totalorder %s28, 1
      %p109 = scmp.ne.s32.totalorder %s104, %s106
      %p110 = scmp.eq.s32.totalorder %s28, 0
      %p111 = por %p109, %p110
      %p112 = scmp.ne.s32.totalorder %s104, %s106
      %p113 = scmp.eq.s32.totalorder %s33, 1
      %p114 = por %p112, %p113
      %p115 = scmp.ne.s32.totalorder %s106, %s107
      %p116 = scmp.eq.s32.totalorder %s33, 0
      %p117 = por %p115, %p116
      %p118 = scmp.ne.s32.totalorder %s106, %s107
      %p119 = scmp.eq.s32.totalorder %s34, 1
      %p120 = por %p118, %p119
      %p122 = scmp.ne.s32.totalorder %s107, %s121
      %p123 = scmp.eq.s32.totalorder %s34, 0
      %p124 = por %p122, %p123
      %s126 = sadd.s32 %s125, 1
      %p129 = scmp.eq.s32.totalorder %s28, 1
      %p130 = scmp.ne.s32.totalorder %s125, %s127
      %p131 = scmp.eq.s32.totalorder %s28, 0
      %p132 = por %p130, %p131
      %p133 = scmp.ne.s32.totalorder %s125, %s127
      %p134 = scmp.eq.s32.totalorder %s33, 1
      %p135 = por %p133, %p134
      %p136 = scmp.ne.s32.totalorder %s127, %s128
      %p137 = scmp.eq.s32.totalorder %s33, 0
      %p138 = por %p136, %p137
      %p139 = scmp.ne.s32.totalorder %s127, %s128
      %p140 = scmp.eq.s32.totalorder %s34, 1
      %p141 = por %p139, %p140
      %p143 = scmp.ne.s32.totalorder %s128, %s142
      %p144 = scmp.eq.s32.totalorder %s34, 0
      %p145 = por %p143, %p144
      %s147 = sadd.s32 %s146, 1
      %p150 = scmp.eq.s32.totalorder %s28, 1
      %p151 = scmp.ne.s32.totalorder %s146, %s148
      %p152 = scmp.eq.s32.totalorder %s28, 0
      %p153 = por %p151, %p152
      %p154 = scmp.ne.s32.totalorder %s146, %s148
      %p155 = scmp.eq.s32.totalorder %s33, 1
      %p156 = por %p154, %p155
      %p157 = scmp.ne.s32.totalorder %s148, %s149
      %p158 = scmp.eq.s32.totalorder %s33, 0
      %p159 = por %p157, %p158
      %p160 = scmp.ne.s32.totalorder %s148, %s149
      %p161 = scmp.eq.s32.totalorder %s34, 1
      %p162 = por %p160, %p161
      %p164 = scmp.ne.s32.totalorder %s149, %s163
      %p165 = scmp.eq.s32.totalorder %s34, 0
      %p166 = por %p164, %p165
      %s168 = sadd.s32 %s167, 1
      %p171 = scmp.eq.s32.totalorder %s28, 1
      %p172 = scmp.ne.s32.totalorder %s167, %s169
      %p173 = scmp.eq.s32.totalorder %s28, 0
      %p174 = por %p172, %p173
      %p175 = scmp.ne.s32.totalorder %s167, %s169
      %p176 = scmp.eq.s32.totalorder %s33, 1
      %p177 = por %p175, %p176
      %p178 = scmp.ne.s32.totalorder %s169, %s170
      %p179 = scmp.eq.s32.totalorder %s33, 0
      %p180 = por %p178, %p179
      %p181 = scmp.ne.s32.totalorder %s169, %s170
      %p182 = scmp.eq.s32.totalorder %s34, 1
      %p183 = por %p181, %p182
      %p185 = scmp.ne.s32.totalorder %s170, %s184
      %p186 = scmp.eq.s32.totalorder %s34, 0
      %p187 = por %p185, %p186
      %s189 = sadd.s32 %s188, 1
      %p192 = scmp.eq.s32.totalorder %s28, 1
      %p193 = scmp.ne.s32.totalorder %s188, %s190
      %p194 = scmp.eq.s32.totalorder %s28, 0
      %p195 = por %p193, %p194
      %p196 = scmp.ne.s32.totalorder %s188, %s190
      %p197 = scmp.eq.s32.totalorder %s33, 1
      %p198 = por %p196, %p197
      %p199 = scmp.ne.s32.totalorder %s190, %s191
      %p200 = scmp.eq.s32.totalorder %s33, 0
      %p201 = por %p199, %p200
      %p202 = scmp.ne.s32.totalorder %s190, %s191
      %p203 = scmp.eq.s32.totalorder %s34, 1
      %p204 = por %p202, %p203
      %p206 = scmp.ne.s32.totalorder %s191, %s205
      %p207 = scmp.eq.s32.totalorder %s34, 0
      %p208 = por %p206, %p207
      %s210 = sadd.s32 %s209, 1
      %p213 = scmp.eq.s32.totalorder %s28, 1
      %p214 = scmp.ne.s32.totalorder %s209, %s211
      %p215 = scmp.eq.s32.totalorder %s28, 0
      %p216 = por %p214, %p215
      %p217 = scmp.ne.s32.totalorder %s209, %s211
      %p218 = scmp.eq.s32.totalorder %s33, 1
      %p219 = por %p217, %p218
      %p220 = scmp.ne.s32.totalorder %s211, %s212
      %p221 = scmp.eq.s32.totalorder %s33, 0
      %p222 = por %p220, %p221
      %p223 = scmp.ne.s32.totalorder %s211, %s212
      %p224 = scmp.eq.s32.totalorder %s34, 1
      %p225 = por %p223, %p224
      %p227 = scmp.ne.s32.totalorder %s212, %s226
      %p228 = scmp.eq.s32.totalorder %s34, 0
      %p229 = por %p227, %p228
      %s231 = sadd.s32 %s230, 1
      %p234 = scmp.eq.s32.totalorder %s28, 1
      %p235 = scmp.ne.s32.totalorder %s230, %s232
      %p236 = scmp.eq.s32.totalorder %s28, 0
      %p237 = por %p235, %p236
      %p238 = scmp.ne.s32.totalorder %s230, %s232
      %p239 = scmp.eq.s32.totalorder %s33, 1
      %p240 = por %p238, %p239
      %p241 = scmp.ne.s32.totalorder %s232, %s233
      %p242 = scmp.eq.s32.totalorder %s33, 0
      %p243 = por %p241, %p242
      %p244 = scmp.ne.s32.totalorder %s232, %s233
      %p245 = scmp.eq.s32.totalorder %s34, 1
      %p246 = por %p244, %p245
      %p248 = scmp.ne.s32.totalorder %s233, %s247
      %p249 = scmp.eq.s32.totalorder %s34, 0
      %p250 = por %p248, %p249
      %s252 = sadd.s32 %s251, 1
      %p255 = scmp.eq.s32.totalorder %s28, 1
      %p256 = scmp.ne.s32.totalorder %s251, %s253
      %p257 = scmp.eq.s32.totalorder %s28, 0
      %p258 = por %p256, %p257
      %p259 = scmp.ne.s32.totalorder %s251, %s253
      %p260 = scmp.eq.s32.totalorder %s33, 1
      %p261 = por %p259, %p260
      %p262 = scmp.ne.s32.totalorder %s253, %s254
      %p263 = scmp.eq.s32.totalorder %s33, 0
      %p264 = por %p262, %p263
      %p265 = scmp.ne.s32.totalorder %s253, %s254
      %p266 = scmp.eq.s32.totalorder %s34, 1
      %p267 = por %p265, %p266
      %p269 = scmp.ne.s32.totalorder %s254, %s268
      %p270 = scmp.eq.s32.totalorder %s34, 0
      %p271 = por %p269, %p270
      %s273 = sadd.s32 %s272, 1
      %p276 = scmp.eq.s32.totalorder %s28, 1
      %p277 = scmp.ne.s32.totalorder %s272, %s274
      %p278 = scmp.eq.s32.totalorder %s28, 0
      %p279 = por %p277, %p278
      %p280 = scmp.ne.s32.totalorder %s272, %s274
      %p281 = scmp.eq.s32.totalorder %s33, 1
      %p282 = por %p280, %p281
      %p283 = scmp.ne.s32.totalorder %s274, %s275
      %p284 = scmp.eq.s32.totalorder %s33, 0
      %p285 = por %p283, %p284
      %p286 = scmp.ne.s32.totalorder %s274, %s275
      %p287 = scmp.eq.s32.totalorder %s34, 1
      %p288 = por %p286, %p287
      %p290 = scmp.ne.s32.totalorder %s275, %s289
      %p291 = scmp.eq.s32.totalorder %s34, 0
      %p292 = por %p290, %p291
      %s294 = sadd.s32 %s293, 1
      %p297 = scmp.eq.s32.totalorder %s28, 1
      %p298 = scmp.ne.s32.totalorder %s293, %s295
      %p299 = scmp.eq.s32.totalorder %s28, 0
      %p300 = por %p298, %p299
      %p301 = scmp.ne.s32.totalorder %s293, %s295
      %p302 = scmp.eq.s32.totalorder %s33, 1
      %p303 = por %p301, %p302
      %p304 = scmp.ne.s32.totalorder %s295, %s296
      %p305 = scmp.eq.s32.totalorder %s33, 0
      %p306 = por %p304, %p305
      %p307 = scmp.ne.s32.totalorder %s295, %s296
      %p308 = scmp.eq.s32.totalorder %s34, 1
      %p309 = por %p307, %p308
      %p311 = scmp.ne.s32.totalorder %s296, %s310
      %p312 = scmp.eq.s32.totalorder %s34, 0
      %p313 = por %p311, %p312
      %s314 = ssub.s32 %s28, %s35
      %p315 = scmp.eq.s32.totalorder %s314, 0
      %s317 = sadd.s32 %s316, 1
      %s318 = scalar_select %p315, %s316, %s317
      %p321 = pneg %p315
      %p322 = scmp.eq.s32.totalorder %s28, 1
      %p323 = por %p321, %p322
      %p324 = scmp.ne.s32.totalorder %s316, %s319
      %p325 = scmp.eq.s32.totalorder %s28, 0
      %p326 = por %p324, %p325
      %p327 = scmp.ne.s32.totalorder %s316, %s319
      %p328 = scmp.eq.s32.totalorder %s33, 1
      %p329 = por %p327, %p328
      %p330 = scmp.ne.s32.totalorder %s319, %s320
      %p331 = scmp.eq.s32.totalorder %s33, 0
      %p332 = por %p330, %p331
      %p333 = scmp.ne.s32.totalorder %s319, %s320
      %p334 = scmp.eq.s32.totalorder %s34, 1
      %p335 = por %p333, %p334
      %p337 = scmp.ne.s32.totalorder %s320, %s336
      %p338 = scmp.eq.s32.totalorder %s34, 0
      %p339 = por %p337, %p338
      %p340 = scmp.le.s32.totalorder 1, %s28
      %p341 = scmp.lt.s32.totalorder %s28, 3
      %p342 = pnand %p340, %p341
      %p343 = pneg %p342
      // Predicated region
      $region9: #{tpu_custom_call.1} parent=5 // pred_check
        _
      $region10: #{tpu_custom_call.1} parent=5 // pred_check_branch
        %345 = sbr.rel (%p342) target = $region12
      $region11: #{tpu_custom_call.1} parent=5 // pred_region
        %s346 = ssub.s32 %s28, 1
        // Predicated region
        $region13: #{tpu_custom_call.1} parent=11 // pred_check
          %p347 = pneg %p75
        $region14: #{tpu_custom_call.1} parent=11 // pred_check_branch
          %349 = sbr.rel (%p347) target = $region16
        $region15: #{tpu_custom_call.1} parent=11 // pred_region
          %351 = vsyncadd [#allocation6], 0
          %s352 = sshll.u32 %s1, 4
          %s353 = int_to_ptr.hbm [resolvable:$true] %s352
          %s354 = sshll.u32 [#allocation5], 4
          %s355 = int_to_ptr.vmem [resolvable:$true] %s354
          %360 = dma.hbm_to_vmem [thread:$0]  %s353, 1024, %s355, [#allocation6], 64, 64, 4
        $region16: #{tpu_custom_call.1} parent=11 // pred_fallthru
          _
        // Predicated region
        $region17: #{tpu_custom_call.1} parent=11 // pred_check
          %p361 = pneg %p96
        $region18: #{tpu_custom_call.1} parent=11 // pred_check_branch
          %363 = sbr.rel (%p361) target = $region20
        $region19: #{tpu_custom_call.1} parent=11 // pred_region
          _
        $region20: #{tpu_custom_call.1} parent=11 // pred_fallthru
          _
        // Predicated region
        $region21: #{tpu_custom_call.1} parent=11 // pred_check
          %p364 = pneg %p117
        $region22: #{tpu_custom_call.1} parent=11 // pred_check_branch
          %366 = sbr.rel (%p364) target = $region24
        $region23: #{tpu_custom_call.1} parent=11 // pred_region
          %368 = vsyncadd [#allocation6], 0
          %s369 = sshll.u32 %s3, 4
          %s370 = int_to_ptr.hbm [resolvable:$true] %s369
          %s371 = sshll.u32 [#allocation7], 4
          %s372 = int_to_ptr.vmem [resolvable:$true] %s371
          %377 = dma.hbm_to_vmem [thread:$0]  %s370, 1024, %s372, [#allocation6], 64, 64, 4
        $region24: #{tpu_custom_call.1} parent=11 // pred_fallthru
          _
        // Predicated region
        $region25: #{tpu_custom_call.1} parent=11 // pred_check
          %p378 = pneg %p138
        $region26: #{tpu_custom_call.1} parent=11 // pred_check_branch
          %380 = sbr.rel (%p378) target = $region28
        $region27: #{tpu_custom_call.1} parent=11 // pred_region
          _
        $region28: #{tpu_custom_call.1} parent=11 // pred_fallthru
          _
        // Predicated region
        $region29: #{tpu_custom_call.1} parent=11 // pred_check
          %p381 = pneg %p159
        $region30: #{tpu_custom_call.1} parent=11 // pred_check_branch
          %383 = sbr.rel (%p381) target = $region32
        $region31: #{tpu_custom_call.1} parent=11 // pred_region
          %385 = vsyncadd [#allocation9], 0
          %s386 = sshll.u32 %s5, 4
          %s387 = int_to_ptr.hbm [resolvable:$true] %s386
          %s388 = sshll.u32 [#allocation8], 4
          %s389 = int_to_ptr.vmem [resolvable:$true] %s388
          %394 = dma.hbm_to_vmem [thread:$0]  %s387, 1024, %s389, [#allocation9], 64, 64, 4
        $region32: #{tpu_custom_call.1} parent=11 // pred_fallthru
          _
        // Predicated region
        $region33: #{tpu_custom_call.1} parent=11 // pred_check
          %p395 = pneg %p180
        $region34: #{tpu_custom_call.1} parent=11 // pred_check_branch
          %397 = sbr.rel (%p395) target = $region36
        $region35: #{tpu_custom_call.1} parent=11 // pred_region
          _
        $region36: #{tpu_custom_call.1} parent=11 // pred_fallthru
          _
        // Predicated region
        $region37: #{tpu_custom_call.1} parent=11 // pred_check
          %p398 = pneg %p201
        $region38: #{tpu_custom_call.1} parent=11 // pred_check_branch
          %400 = sbr.rel (%p398) target = $region40
        $region39: #{tpu_custom_call.1} parent=11 // pred_region
          %402 = vsyncadd [#allocation9], 0
          %s403 = sshll.u32 %s7, 4
          %s404 = int_to_ptr.hbm [resolvable:$true] %s403
          %s405 = sshll.u32 [#allocation10], 4
          %s406 = int_to_ptr.vmem [resolvable:$true] %s405
          %411 = dma.hbm_to_vmem [thread:$0]  %s404, 1024, %s406, [#allocation9], 64, 64, 4
        $region40: #{tpu_custom_call.1} parent=11 // pred_fallthru
          _
        // Predicated region
        $region41: #{tpu_custom_call.1} parent=11 // pred_check
          %p412 = pneg %p222
        $region42: #{tpu_custom_call.1} parent=11 // pred_check_branch
          %414 = sbr.rel (%p412) target = $region44
        $region43: #{tpu_custom_call.1} parent=11 // pred_region
          _
        $region44: #{tpu_custom_call.1} parent=11 // pred_fallthru
          _
        // Predicated region
        $region45: #{tpu_custom_call.1} parent=11 // pred_check
          %p415 = pneg %p243
        $region46: #{tpu_custom_call.1} parent=11 // pred_check_branch
          %417 = sbr.rel (%p415) target = $region48
        $region47: #{tpu_custom_call.1} parent=11 // pred_region
          %419 = vsyncadd [#allocation12], 0
          %s420 = sshll.u32 %s9, 4
          %s421 = int_to_ptr.hbm [resolvable:$true] %s420
          %s422 = sshll.u32 [#allocation11], 4
          %s423 = int_to_ptr.vmem [resolvable:$true] %s422
          %428 = dma.hbm_to_vmem [thread:$0]  %s421, 1024, %s423, [#allocation12], 64, 64, 4
        $region48: #{tpu_custom_call.1} parent=11 // pred_fallthru
          _
        // Predicated region
        $region49: #{tpu_custom_call.1} parent=11 // pred_check
          %p429 = pneg %p264
        $region50: #{tpu_custom_call.1} parent=11 // pred_check_branch
          %431 = sbr.rel (%p429) target = $region52
        $region51: #{tpu_custom_call.1} parent=11 // pred_region
          _
        $region52: #{tpu_custom_call.1} parent=11 // pred_fallthru
          _
        // Predicated region
        $region53: #{tpu_custom_call.1} parent=11 // pred_check
          %p432 = pneg %p285
        $region54: #{tpu_custom_call.1} parent=11 // pred_check_branch
          %434 = sbr.rel (%p432) target = $region56
        $region55: #{tpu_custom_call.1} parent=11 // pred_region
          %436 = vsyncadd [#allocation12], 0
          %s437 = sshll.u32 %s11, 4
          %s438 = int_to_ptr.hbm [resolvable:$true] %s437
          %s439 = sshll.u32 [#allocation13], 4
          %s440 = int_to_ptr.vmem [resolvable:$true] %s439
          %445 = dma.hbm_to_vmem [thread:$0]  %s438, 1024, %s440, [#allocation12], 64, 64, 4
        $region56: #{tpu_custom_call.1} parent=11 // pred_fallthru
          _
        // Predicated region
        $region57: #{tpu_custom_call.1} parent=11 // pred_check
          %p446 = pneg %p306
        $region58: #{tpu_custom_call.1} parent=11 // pred_check_branch
          %448 = sbr.rel (%p446) target = $region60
        $region59: #{tpu_custom_call.1} parent=11 // pred_region
          _
        $region60: #{tpu_custom_call.1} parent=11 // pred_fallthru
          _
      $region12: #{tpu_custom_call.1} parent=5 // pred_fallthru
        _
      %p449 = scmp.lt.s32.totalorder %s28, 2
      // Predicated region
      $region61: #{tpu_custom_call.1} parent=5 // pred_check
        %p450 = pneg %p449
      $region62: #{tpu_custom_call.1} parent=5 // pred_check_branch
        %452 = sbr.rel (%p450) target = $region64
      $region63: #{tpu_custom_call.1} parent=5 // pred_region
        // Predicated region
        $region65: #{tpu_custom_call.1} parent=63 // pred_check
          %p453 = pneg %p48
        $region66: #{tpu_custom_call.1} parent=63 // pred_check_branch
          %455 = sbr.rel (%p453) target = $region68
        $region67: #{tpu_custom_call.1} parent=63 // pred_region
          %s456 = sand.u32 %s38, 1
          %s457 = scalar_lea.sflag [#allocation3], %s456
          %s458 = sand.u32 %s38, 1
          %s459 = smul.addr %s458, 4
          %s460 = scalar_lea.vmem [#allocation2], %s459
          %462 = vsyncadd %s457, 0
          %s463 = smul.addr %s28, 4
          %s464 = scalar_lea.hbm %s0, %s463
          %s466 = sshll.u32 %s464, 4
          %s467 = int_to_ptr.hbm [resolvable:$true] %s466
          %s468 = sshll.u32 %s460, 4
          %s469 = int_to_ptr.vmem [resolvable:$true] %s468
          %471 = dma.hbm_to_vmem [thread:$0]  %s467, 64, %s469, %s457
        $region68: #{tpu_custom_call.1} parent=63 // pred_fallthru
          _
      $region64: #{tpu_custom_call.1} parent=5 // pred_fallthru
        _
      %p472 = scmp.le.s32.totalorder 1, %s28
      %p473 = scmp.lt.s32.totalorder %s28, 3
      %p474 = pnand %p472, %p473
      %p475 = pneg %p474
      // Predicated region
      $region69: #{tpu_custom_call.1} parent=5 // pred_check
        _
      $region70: #{tpu_custom_call.1} parent=5 // pred_check_branch
        %477 = sbr.rel (%p474) target = $region72
      $region71: #{tpu_custom_call.1} parent=5 // pred_region
        %s478 = ssub.s32 %s28, 1
        %s479 = sand.u32 %s41, 1
        %s480 = scalar_lea.sflag [#allocation3], %s479
        %s481 = sand.u32 %s41, 1
        %s482 = smul.addr %s481, 4
        %s483 = scalar_lea.vmem [#allocation2], %s482
        // Predicated region
        $region73: #{tpu_custom_call.1} parent=71 // pred_check
          %p484 = pneg %p54
        $region74: #{tpu_custom_call.1} parent=71 // pred_check_branch
          %486 = sbr.rel (%p484) target = $region76
        $region75: #{tpu_custom_call.1} parent=71 // pred_region
          %488 = dma.done %s480, 64
        $region76: #{tpu_custom_call.1} parent=71 // pred_fallthru
          _
        // Predicated region
        $region77: #{tpu_custom_call.1} parent=71 // pred_check
          %p489 = pneg %p75
        $region78: #{tpu_custom_call.1} parent=71 // pred_check_branch
          %491 = sbr.rel (%p489) target = $region80
        $region79: #{tpu_custom_call.1} parent=71 // pred_region
          %493 = dma.done [#allocation6], 1024
        $region80: #{tpu_custom_call.1} parent=71 // pred_fallthru
          _
        // Predicated region
        $region81: #{tpu_custom_call.1} parent=71 // pred_check
          %p494 = pneg %p117
        $region82: #{tpu_custom_call.1} parent=71 // pred_check_branch
          %496 = sbr.rel (%p494) target = $region84
        $region83: #{tpu_custom_call.1} parent=71 // pred_region
          %498 = dma.done [#allocation6], 1024
        $region84: #{tpu_custom_call.1} parent=71 // pred_fallthru
          _
        // Predicated region
        $region85: #{tpu_custom_call.1} parent=71 // pred_check
          %p499 = pneg %p159
        $region86: #{tpu_custom_call.1} parent=71 // pred_check_branch
          %501 = sbr.rel (%p499) target = $region88
        $region87: #{tpu_custom_call.1} parent=71 // pred_region
          %503 = dma.done [#allocation9], 1024
        $region88: #{tpu_custom_call.1} parent=71 // pred_fallthru
          _
        // Predicated region
        $region89: #{tpu_custom_call.1} parent=71 // pred_check
          %p504 = pneg %p201
        $region90: #{tpu_custom_call.1} parent=71 // pred_check_branch
          %506 = sbr.rel (%p504) target = $region92
        $region91: #{tpu_custom_call.1} parent=71 // pred_region
          %508 = dma.done [#allocation9], 1024
        $region92: #{tpu_custom_call.1} parent=71 // pred_fallthru
          _
        // Predicated region
        $region93: #{tpu_custom_call.1} parent=71 // pred_check
          %p509 = pneg %p243
        $region94: #{tpu_custom_call.1} parent=71 // pred_check_branch
          %511 = sbr.rel (%p509) target = $region96
        $region95: #{tpu_custom_call.1} parent=71 // pred_region
          %513 = dma.done [#allocation12], 1024
        $region96: #{tpu_custom_call.1} parent=71 // pred_fallthru
          _
        // Predicated region
        $region97: #{tpu_custom_call.1} parent=71 // pred_check
          %p514 = pneg %p285
        $region98: #{tpu_custom_call.1} parent=71 // pred_check_branch
          %516 = sbr.rel (%p514) target = $region100
        $region99: #{tpu_custom_call.1} parent=71 // pred_region
          %518 = dma.done [#allocation12], 1024
        $region100: #{tpu_custom_call.1} parent=71 // pred_fallthru
          _
        %s519 = sand.u32 %s41, 1
        %s520 = scalar_lea.sflag [#allocation3], %s519
        %s521 = sand.u32 %s41, 1
        %s522 = smul.addr %s521, 4
        %s523 = scalar_lea.vmem [#allocation2], %s522
        %p524 = pneg %p54
        %p525 = pneg %p51
        %p526 = pneg %p75
        %p527 = pneg %p72
        %p528 = pneg %p96
        %p529 = pneg %p93
        %p530 = pneg %p117
        %p531 = pneg %p114
        %p532 = pneg %p138
        %p533 = pneg %p135
        %p534 = pneg %p159
        %p535 = pneg %p156
        %p536 = pneg %p180
        %p537 = pneg %p177
        %p538 = pneg %p201
        %p539 = pneg %p198
        %p540 = pneg %p222
        %p541 = pneg %p219
        %p542 = pneg %p243
        %p543 = pneg %p240
        %p544 = pneg %p264
        %p545 = pneg %p261
        %p546 = pneg %p285
        %p547 = pneg %p282
        %p548 = pneg %p306
        %p549 = pneg %p303
        %p550 = pneg %p332
        %p551 = pneg %p329
        %s552 = sand.u32 %s319, 1
        %s553 = scalar_lea.sflag [#allocation4], %s552
        %s554 = sand.u32 %s319, 1
        %s555 = smul.addr %s554, 8
        %s556 = scalar_lea.vmem [#allocation14], %s555
        %v557 = vld [vmem:[%s483] sm:$0xf]
        %v558 = vld [vmem:[#allocation5] sm:$0xf]
        %v559 = vld [vmem:[#allocation5 + $0x4] sm:$0xf]
        %v560 = vld [vmem:[#allocation5 + $0x8] sm:$0xf]
        %v561 = vld [vmem:[#allocation5 + $0xc] sm:$0xf]
        %v562 = vld [vmem:[#allocation5 + $0x10] sm:$0xf]
        %v563 = vld [vmem:[#allocation5 + $0x14] sm:$0xf]
        %v564 = vld [vmem:[#allocation5 + $0x18] sm:$0xf]
        %v565 = vld [vmem:[#allocation5 + $0x1c] sm:$0xf]
        %v566 = vld [vmem:[#allocation5 + $0x20] sm:$0xf]
        %v567 = vld [vmem:[#allocation5 + $0x24] sm:$0xf]
        %v568 = vld [vmem:[#allocation5 + $0x28] sm:$0xf]
        %v569 = vld [vmem:[#allocation5 + $0x2c] sm:$0xf]
        %v570 = vld [vmem:[#allocation5 + $0x30] sm:$0xf]
        %v571 = vld [vmem:[#allocation5 + $0x34] sm:$0xf]
        %v572 = vld [vmem:[#allocation5 + $0x38] sm:$0xf]
        %v573 = vld [vmem:[#allocation5 + $0x3c] sm:$0xf]
        %v574 = vld [vmem:[%s2] sm:$0x1]
        %v576 = vperm.slane %v574, 0
        %v594 = vunpack.c.l.b16 %v558
        %v595 = vunpack.c.l.b16 %v559
        %v596 = vunpack.c.l.b16 %v560
        %v597 = vunpack.c.l.b16 %v561
        %v598 = vunpack.c.l.b16 %v562
        %v599 = vunpack.c.l.b16 %v563
        %v600 = vunpack.c.l.b16 %v564
        %v601 = vunpack.c.l.b16 %v565
        %v602 = vunpack.c.l.b16 %v566
        %v603 = vunpack.c.l.b16 %v567
        %v604 = vunpack.c.l.b16 %v568
        %v605 = vunpack.c.l.b16 %v569
        %v606 = vunpack.c.l.b16 %v570
        %v607 = vunpack.c.l.b16 %v571
        %v608 = vunpack.c.l.b16 %v572
        %v609 = vunpack.c.l.b16 %v573
        %v610 = vpack.c.b16 %v595, %v594
        %v611 = vpack.c.b16 %v597, %v596
        %v612 = vpack.c.b16 %v599, %v598
        %v613 = vpack.c.b16 %v601, %v600
        %v614 = vpack.c.b16 %v603, %v602
        %v615 = vpack.c.b16 %v605, %v604
        %v616 = vpack.c.b16 %v607, %v606
        %v617 = vpack.c.b16 %v609, %v608
        %626 = vmatpush.bf16.msra.mxu0 %v617
        %627 = vmatpush.bf16.msra.mxu0 %v616
        %628 = vmatpush.bf16.msra.mxu0 %v615
        %629 = vmatpush.bf16.msra.mxu0 %v614
        %630 = vmatpush.bf16.msra.mxu0 %v613
        %631 = vmatpush.bf16.msra.mxu0 %v612
        %632 = vmatpush.bf16.msra.mxu0 %v611
        %633 = vmatpush.bf16.msra.mxu0 %v610
        %634 = vmatmul.bf16.gmra.mxu0 %v557
        %v635 = vpop.f32.mrf.mxu0
        %v636 = vadd.f32 %v576, %v635
        %v637 = vpop.f32.mrf.mxu0
        %638 = vdwg.mxu0
        %vm639 = vcmp.gt.f32.partialorder %v636, 0.0
        %v640 = vmul.f32 %v636, 0.01
        %v641 = vsel %vm639, %v636, %v640
        %v642 = vpack.c.bf16 %v641, %v641
        %v643 = vld [vmem:[#allocation7] sm:$0xf]
        %v644 = vld [vmem:[#allocation7 + $0x4] sm:$0xf]
        %v645 = vld [vmem:[#allocation7 + $0x8] sm:$0xf]
        %v646 = vld [vmem:[#allocation7 + $0xc] sm:$0xf]
        %v647 = vld [vmem:[#allocation7 + $0x10] sm:$0xf]
        %v648 = vld [vmem:[#allocation7 + $0x14] sm:$0xf]
        %v649 = vld [vmem:[#allocation7 + $0x18] sm:$0xf]
        %v650 = vld [vmem:[#allocation7 + $0x1c] sm:$0xf]
        %v651 = vld [vmem:[#allocation7 + $0x20] sm:$0xf]
        %v652 = vld [vmem:[#allocation7 + $0x24] sm:$0xf]
        %v653 = vld [vmem:[#allocation7 + $0x28] sm:$0xf]
        %v654 = vld [vmem:[#allocation7 + $0x2c] sm:$0xf]
        %v655 = vld [vmem:[#allocation7 + $0x30] sm:$0xf]
        %v656 = vld [vmem:[#allocation7 + $0x34] sm:$0xf]
        %v657 = vld [vmem:[#allocation7 + $0x38] sm:$0xf]
        %v658 = vld [vmem:[#allocation7 + $0x3c] sm:$0xf]
        %v659 = vld [vmem:[%s4] sm:$0x1]
        %v661 = vperm.slane %v659, 0
        %v679 = vunpack.c.l.b16 %v643
        %v680 = vunpack.c.l.b16 %v644
        %v681 = vunpack.c.l.b16 %v645
        %v682 = vunpack.c.l.b16 %v646
        %v683 = vunpack.c.l.b16 %v647
        %v684 = vunpack.c.l.b16 %v648
        %v685 = vunpack.c.l.b16 %v649
        %v686 = vunpack.c.l.b16 %v650
        %v687 = vunpack.c.l.b16 %v651
        %v688 = vunpack.c.l.b16 %v652
        %v689 = vunpack.c.l.b16 %v653
        %v690 = vunpack.c.l.b16 %v654
        %v691 = vunpack.c.l.b16 %v655
        %v692 = vunpack.c.l.b16 %v656
        %v693 = vunpack.c.l.b16 %v657
        %v694 = vunpack.c.l.b16 %v658
        %v695 = vpack.c.b16 %v680, %v679
        %v696 = vpack.c.b16 %v682, %v681
        %v697 = vpack.c.b16 %v684, %v683
        %v698 = vpack.c.b16 %v686, %v685
        %v699 = vpack.c.b16 %v688, %v687
        %v700 = vpack.c.b16 %v690, %v689
        %v701 = vpack.c.b16 %v692, %v691
        %v702 = vpack.c.b16 %v694, %v693
        %711 = vmatpush.bf16.msra.mxu0 %v702
        %712 = vmatpush.bf16.msra.mxu0 %v701
        %713 = vmatpush.bf16.msra.mxu0 %v700
        %714 = vmatpush.bf16.msra.mxu0 %v699
        %715 = vmatpush.bf16.msra.mxu0 %v698
        %716 = vmatpush.bf16.msra.mxu0 %v697
        %717 = vmatpush.bf16.msra.mxu0 %v696
        %718 = vmatpush.bf16.msra.mxu0 %v695
        %719 = vmatmul.bf16.gmra.mxu0 %v642
        %v720 = vpop.f32.mrf.mxu0
        %v721 = vadd.f32 %v661, %v720
        %v722 = vpop.f32.mrf.mxu0
        %723 = vdwg.mxu0
        %vm724 = vcmp.gt.f32.partialorder %v721, 0.0
        %v725 = vmul.f32 %v721, 0.01
        %v726 = vsel %vm724, %v721, %v725
        %v727 = vpack.c.bf16 %v726, %v726
        %v728 = vld [vmem:[#allocation8] sm:$0xf]
        %v729 = vld [vmem:[#allocation8 + $0x4] sm:$0xf]
        %v730 = vld [vmem:[#allocation8 + $0x8] sm:$0xf]
        %v731 = vld [vmem:[#allocation8 + $0xc] sm:$0xf]
        %v732 = vld [vmem:[#allocation8 + $0x10] sm:$0xf]
        %v733 = vld [vmem:[#allocation8 + $0x14] sm:$0xf]
        %v734 = vld [vmem:[#allocation8 + $0x18] sm:$0xf]
        %v735 = vld [vmem:[#allocation8 + $0x1c] sm:$0xf]
        %v736 = vld [vmem:[#allocation8 + $0x20] sm:$0xf]
        %v737 = vld [vmem:[#allocation8 + $0x24] sm:$0xf]
        %v738 = vld [vmem:[#allocation8 + $0x28] sm:$0xf]
        %v739 = vld [vmem:[#allocation8 + $0x2c] sm:$0xf]
        %v740 = vld [vmem:[#allocation8 + $0x30] sm:$0xf]
        %v741 = vld [vmem:[#allocation8 + $0x34] sm:$0xf]
        %v742 = vld [vmem:[#allocation8 + $0x38] sm:$0xf]
        %v743 = vld [vmem:[#allocation8 + $0x3c] sm:$0xf]
        %v744 = vld [vmem:[%s6] sm:$0x1]
        %v746 = vperm.slane %v744, 0
        %v764 = vunpack.c.l.b16 %v728
        %v765 = vunpack.c.l.b16 %v729
        %v766 = vunpack.c.l.b16 %v730
        %v767 = vunpack.c.l.b16 %v731
        %v768 = vunpack.c.l.b16 %v732
        %v769 = vunpack.c.l.b16 %v733
        %v770 = vunpack.c.l.b16 %v734
        %v771 = vunpack.c.l.b16 %v735
        %v772 = vunpack.c.l.b16 %v736
        %v773 = vunpack.c.l.b16 %v737
        %v774 = vunpack.c.l.b16 %v738
        %v775 = vunpack.c.l.b16 %v739
        %v776 = vunpack.c.l.b16 %v740
        %v777 = vunpack.c.l.b16 %v741
        %v778 = vunpack.c.l.b16 %v742
        %v779 = vunpack.c.l.b16 %v743
        %v780 = vpack.c.b16 %v765, %v764
        %v781 = vpack.c.b16 %v767, %v766
        %v782 = vpack.c.b16 %v769, %v768
        %v783 = vpack.c.b16 %v771, %v770
        %v784 = vpack.c.b16 %v773, %v772
        %v785 = vpack.c.b16 %v775, %v774
        %v786 = vpack.c.b16 %v777, %v776
        %v787 = vpack.c.b16 %v779, %v778
        %796 = vmatpush.bf16.msra.mxu0 %v787
        %797 = vmatpush.bf16.msra.mxu0 %v786
        %798 = vmatpush.bf16.msra.mxu0 %v785
        %799 = vmatpush.bf16.msra.mxu0 %v784
        %800 = vmatpush.bf16.msra.mxu0 %v783
        %801 = vmatpush.bf16.msra.mxu0 %v782
        %802 = vmatpush.bf16.msra.mxu0 %v781
        %803 = vmatpush.bf16.msra.mxu0 %v780
        %804 = vmatmul.bf16.gmra.mxu0 %v727
        %v805 = vpop.f32.mrf.mxu0
        %v806 = vadd.f32 %v746, %v805
        %v807 = vpop.f32.mrf.mxu0
        %808 = vdwg.mxu0
        %vm809 = vcmp.gt.f32.partialorder %v806, 0.0
        %v810 = vmul.f32 %v806, 0.01
        %v811 = vsel %vm809, %v806, %v810
        %v812 = vpack.c.bf16 %v811, %v811
        %v813 = vld [vmem:[#allocation10] sm:$0xf]
        %v814 = vld [vmem:[#allocation10 + $0x4] sm:$0xf]
        %v815 = vld [vmem:[#allocation10 + $0x8] sm:$0xf]
        %v816 = vld [vmem:[#allocation10 + $0xc] sm:$0xf]
        %v817 = vld [vmem:[#allocation10 + $0x10] sm:$0xf]
        %v818 = vld [vmem:[#allocation10 + $0x14] sm:$0xf]
        %v819 = vld [vmem:[#allocation10 + $0x18] sm:$0xf]
        %v820 = vld [vmem:[#allocation10 + $0x1c] sm:$0xf]
        %v821 = vld [vmem:[#allocation10 + $0x20] sm:$0xf]
        %v822 = vld [vmem:[#allocation10 + $0x24] sm:$0xf]
        %v823 = vld [vmem:[#allocation10 + $0x28] sm:$0xf]
        %v824 = vld [vmem:[#allocation10 + $0x2c] sm:$0xf]
        %v825 = vld [vmem:[#allocation10 + $0x30] sm:$0xf]
        %v826 = vld [vmem:[#allocation10 + $0x34] sm:$0xf]
        %v827 = vld [vmem:[#allocation10 + $0x38] sm:$0xf]
        %v828 = vld [vmem:[#allocation10 + $0x3c] sm:$0xf]
        %v829 = vld [vmem:[%s8] sm:$0x1]
        %v831 = vperm.slane %v829, 0
        %v849 = vunpack.c.l.b16 %v813
        %v850 = vunpack.c.l.b16 %v814
        %v851 = vunpack.c.l.b16 %v815
        %v852 = vunpack.c.l.b16 %v816
        %v853 = vunpack.c.l.b16 %v817
        %v854 = vunpack.c.l.b16 %v818
        %v855 = vunpack.c.l.b16 %v819
        %v856 = vunpack.c.l.b16 %v820
        %v857 = vunpack.c.l.b16 %v821
        %v858 = vunpack.c.l.b16 %v822
        %v859 = vunpack.c.l.b16 %v823
        %v860 = vunpack.c.l.b16 %v824
        %v861 = vunpack.c.l.b16 %v825
        %v862 = vunpack.c.l.b16 %v826
        %v863 = vunpack.c.l.b16 %v827
        %v864 = vunpack.c.l.b16 %v828
        %v865 = vpack.c.b16 %v850, %v849
        %v866 = vpack.c.b16 %v852, %v851
        %v867 = vpack.c.b16 %v854, %v853
        %v868 = vpack.c.b16 %v856, %v855
        %v869 = vpack.c.b16 %v858, %v857
        %v870 = vpack.c.b16 %v860, %v859
        %v871 = vpack.c.b16 %v862, %v861
        %v872 = vpack.c.b16 %v864, %v863
        %881 = vmatpush.bf16.msra.mxu0 %v872
        %882 = vmatpush.bf16.msra.mxu0 %v871
        %883 = vmatpush.bf16.msra.mxu0 %v870
        %884 = vmatpush.bf16.msra.mxu0 %v869
        %885 = vmatpush.bf16.msra.mxu0 %v868
        %886 = vmatpush.bf16.msra.mxu0 %v867
        %887 = vmatpush.bf16.msra.mxu0 %v866
        %888 = vmatpush.bf16.msra.mxu0 %v865
        %889 = vmatmul.bf16.gmra.mxu0 %v812
        %v890 = vpop.f32.mrf.mxu0
        %v891 = vadd.f32 %v831, %v890
        %v892 = vpop.f32.mrf.mxu0
        %893 = vdwg.mxu0
        %vm894 = vcmp.gt.f32.partialorder %v891, 0.0
        %v895 = vmul.f32 %v891, 0.01
        %v896 = vsel %vm894, %v891, %v895
        %v897 = vpack.c.bf16 %v896, %v896
        %v898 = vld [vmem:[#allocation11] sm:$0xf]
        %v899 = vld [vmem:[#allocation11 + $0x4] sm:$0xf]
        %v900 = vld [vmem:[#allocation11 + $0x8] sm:$0xf]
        %v901 = vld [vmem:[#allocation11 + $0xc] sm:$0xf]
        %v902 = vld [vmem:[#allocation11 + $0x10] sm:$0xf]
        %v903 = vld [vmem:[#allocation11 + $0x14] sm:$0xf]
        %v904 = vld [vmem:[#allocation11 + $0x18] sm:$0xf]
        %v905 = vld [vmem:[#allocation11 + $0x1c] sm:$0xf]
        %v906 = vld [vmem:[#allocation11 + $0x20] sm:$0xf]
        %v907 = vld [vmem:[#allocation11 + $0x24] sm:$0xf]
        %v908 = vld [vmem:[#allocation11 + $0x28] sm:$0xf]
        %v909 = vld [vmem:[#allocation11 + $0x2c] sm:$0xf]
        %v910 = vld [vmem:[#allocation11 + $0x30] sm:$0xf]
        %v911 = vld [vmem:[#allocation11 + $0x34] sm:$0xf]
        %v912 = vld [vmem:[#allocation11 + $0x38] sm:$0xf]
        %v913 = vld [vmem:[#allocation11 + $0x3c] sm:$0xf]
        %v914 = vld [vmem:[%s10] sm:$0x1]
        %v916 = vperm.slane %v914, 0
        %v934 = vunpack.c.l.b16 %v898
        %v935 = vunpack.c.l.b16 %v899
        %v936 = vunpack.c.l.b16 %v900
        %v937 = vunpack.c.l.b16 %v901
        %v938 = vunpack.c.l.b16 %v902
        %v939 = vunpack.c.l.b16 %v903
        %v940 = vunpack.c.l.b16 %v904
        %v941 = vunpack.c.l.b16 %v905
        %v942 = vunpack.c.l.b16 %v906
        %v943 = vunpack.c.l.b16 %v907
        %v944 = vunpack.c.l.b16 %v908
        %v945 = vunpack.c.l.b16 %v909
        %v946 = vunpack.c.l.b16 %v910
        %v947 = vunpack.c.l.b16 %v911
        %v948 = vunpack.c.l.b16 %v912
        %v949 = vunpack.c.l.b16 %v913
        %v950 = vpack.c.b16 %v935, %v934
        %v951 = vpack.c.b16 %v937, %v936
        %v952 = vpack.c.b16 %v939, %v938
        %v953 = vpack.c.b16 %v941, %v940
        %v954 = vpack.c.b16 %v943, %v942
        %v955 = vpack.c.b16 %v945, %v944
        %v956 = vpack.c.b16 %v947, %v946
        %v957 = vpack.c.b16 %v949, %v948
        %966 = vmatpush.bf16.msra.mxu0 %v957
        %967 = vmatpush.bf16.msra.mxu0 %v956
        %968 = vmatpush.bf16.msra.mxu0 %v955
        %969 = vmatpush.bf16.msra.mxu0 %v954
        %970 = vmatpush.bf16.msra.mxu0 %v953
        %971 = vmatpush.bf16.msra.mxu0 %v952
        %972 = vmatpush.bf16.msra.mxu0 %v951
        %973 = vmatpush.bf16.msra.mxu0 %v950
        %974 = vmatmul.bf16.gmra.mxu0 %v897
        %v975 = vpop.f32.mrf.mxu0
        %v976 = vadd.f32 %v916, %v975
        %v977 = vpop.f32.mrf.mxu0
        %978 = vdwg.mxu0
        %vm979 = vcmp.gt.f32.partialorder %v976, 0.0
        %v980 = vmul.f32 %v976, 0.01
        %v981 = vsel %vm979, %v976, %v980
        %v982 = vpack.c.bf16 %v981, %v981
        %v983 = vld [vmem:[#allocation13] sm:$0xf]
        %v984 = vld [vmem:[#allocation13 + $0x4] sm:$0xf]
        %v985 = vld [vmem:[#allocation13 + $0x8] sm:$0xf]
        %v986 = vld [vmem:[#allocation13 + $0xc] sm:$0xf]
        %v987 = vld [vmem:[#allocation13 + $0x10] sm:$0xf]
        %v988 = vld [vmem:[#allocation13 + $0x14] sm:$0xf]
        %v989 = vld [vmem:[#allocation13 + $0x18] sm:$0xf]
        %v990 = vld [vmem:[#allocation13 + $0x1c] sm:$0xf]
        %v991 = vld [vmem:[#allocation13 + $0x20] sm:$0xf]
        %v992 = vld [vmem:[#allocation13 + $0x24] sm:$0xf]
        %v993 = vld [vmem:[#allocation13 + $0x28] sm:$0xf]
        %v994 = vld [vmem:[#allocation13 + $0x2c] sm:$0xf]
        %v995 = vld [vmem:[#allocation13 + $0x30] sm:$0xf]
        %v996 = vld [vmem:[#allocation13 + $0x34] sm:$0xf]
        %v997 = vld [vmem:[#allocation13 + $0x38] sm:$0xf]
        %v998 = vld [vmem:[#allocation13 + $0x3c] sm:$0xf]
        %v999 = vld [vmem:[%s12] sm:$0x1]
        %v1001 = vperm.slane %v999, 0
        %v1019 = vunpack.c.l.b16 %v983
        %v1020 = vunpack.c.l.b16 %v984
        %v1021 = vunpack.c.l.b16 %v985
        %v1022 = vunpack.c.l.b16 %v986
        %v1023 = vunpack.c.l.b16 %v987
        %v1024 = vunpack.c.l.b16 %v988
        %v1025 = vunpack.c.l.b16 %v989
        %v1026 = vunpack.c.l.b16 %v990
        %v1027 = vunpack.c.l.b16 %v991
        %v1028 = vunpack.c.l.b16 %v992
        %v1029 = vunpack.c.l.b16 %v993
        %v1030 = vunpack.c.l.b16 %v994
        %v1031 = vunpack.c.l.b16 %v995
        %v1032 = vunpack.c.l.b16 %v996
        %v1033 = vunpack.c.l.b16 %v997
        %v1034 = vunpack.c.l.b16 %v998
        %v1035 = vpack.c.b16 %v1020, %v1019
        %v1036 = vpack.c.b16 %v1022, %v1021
        %v1037 = vpack.c.b16 %v1024, %v1023
        %v1038 = vpack.c.b16 %v1026, %v1025
        %v1039 = vpack.c.b16 %v1028, %v1027
        %v1040 = vpack.c.b16 %v1030, %v1029
        %v1041 = vpack.c.b16 %v1032, %v1031
        %v1042 = vpack.c.b16 %v1034, %v1033
        %1051 = vmatpush.bf16.msra.mxu0 %v1042
        %1052 = vmatpush.bf16.msra.mxu0 %v1041
        %1053 = vmatpush.bf16.msra.mxu0 %v1040
        %1054 = vmatpush.bf16.msra.mxu0 %v1039
        %1055 = vmatpush.bf16.msra.mxu0 %v1038
        %1056 = vmatpush.bf16.msra.mxu0 %v1037
        %1057 = vmatpush.bf16.msra.mxu0 %v1036
        %1058 = vmatpush.bf16.msra.mxu0 %v1035
        %1059 = vmatmul.bf16.gmra.mxu0 %v982
        %v1060 = vpop.f32.mrf.mxu0
        %v1061 = vadd.f32 %v1001, %v1060
        %v1062 = vpop.f32.mrf.mxu0
        %1063 = vdwg.mxu0
        %vm1064 = vcmp.gt.f32.partialorder %v1061, 0.0
        %v1065 = vmul.f32 %v1061, 0.01
        %v1066 = vsel %vm1064, %v1061, %v1065
        %1067 = vst [vmem:[%s556] sm:$0xff] %v1066
        %s1068 = sand.u32 %s319, 1
        %s1069 = scalar_lea.sflag [#allocation4], %s1068
        %s1070 = sand.u32 %s319, 1
        %s1071 = smul.addr %s1070, 8
        %s1072 = scalar_lea.vmem [#allocation14], %s1071
        // Predicated region
        $region101: #{tpu_custom_call.1} parent=71 // pred_check
          %p1073 = pneg %p329
        $region102: #{tpu_custom_call.1} parent=71 // pred_check_branch
          %1075 = sbr.rel (%p1073) target = $region104
        $region103: #{tpu_custom_call.1} parent=71 // pred_region
          %1077 = vsyncadd %s1069, 0
          %s1078 = smul.addr %s33, 8
          %s1079 = scalar_lea.hbm %s13, %s1078
          %s1081 = sshll.u32 %s1072, 4
          %s1082 = int_to_ptr.vmem [resolvable:$true] %s1081
          %s1083 = sshll.u32 %s1079, 4
          %s1084 = int_to_ptr.hbm [resolvable:$true] %s1083
          %1086 = dma.vmem_to_hbm [thread:$0]  %s1082, 128, %s1084, %s1069
        $region104: #{tpu_custom_call.1} parent=71 // pred_fallthru
          _
      $region72: #{tpu_custom_call.1} parent=5 // pred_fallthru
        _
      %p1087 = scmp.le.s32.totalorder 2, %s28
      // Predicated region
      $region105: #{tpu_custom_call.1} parent=5 // pred_check
        %p1088 = pneg %p1087
      $region106: #{tpu_custom_call.1} parent=5 // pred_check_branch
        %1090 = sbr.rel (%p1088) target = $region108
      $region107: #{tpu_custom_call.1} parent=5 // pred_region
        %s1091 = ssub.s32 %s28, 2
        // Predicated region
        $region109: #{tpu_custom_call.1} parent=107 // pred_check
          %p1092 = pneg %p335
        $region110: #{tpu_custom_call.1} parent=107 // pred_check_branch
          %1094 = sbr.rel (%p1092) target = $region112
        $region111: #{tpu_custom_call.1} parent=107 // pred_region
          %s1095 = sand.u32 %s320, 1
          %s1096 = scalar_lea.sflag [#allocation4], %s1095
          %s1097 = sand.u32 %s320, 1
          %s1098 = smul.addr %s1097, 8
          %s1099 = scalar_lea.vmem [#allocation14], %s1098
          %1101 = dma.done %s1096, 128
        $region112: #{tpu_custom_call.1} parent=107 // pred_fallthru
          _
      $region108: #{tpu_custom_call.1} parent=5 // pred_fallthru
        _
    $region6: #{tpu_custom_call.1} parent=1 // loop_footer
      %s32 = sadd.s32 1, %s28
    $region7: #{tpu_custom_call.1} parent=1 // loop_footer_branch
      %27 = sbr.rel target = $region3
    $region8: #{tpu_custom_call.1} parent=1 // loop_exit
      _
    %1102 = vsyncpa [#allocation3], 1
    %s1103 = scalar_lea.sflag [#allocation3], 1
    %1104 = vsyncpa %s1103, 1
    %1105 = vsyncpa [#allocation6], 1
    %1106 = vsyncpa [#allocation9], 1
    %1107 = vsyncpa [#allocation12], 1
    %1108 = vsyncpa [#allocation4], 1
    %s1109 = scalar_lea.sflag [#allocation4], 1
    %1110 = vsyncpa %s1109, 1

</llo_original>
